<compile_context>
chip_gen: v7x
topology: tpu7x:2x2x1
jax: 0.10.0
libtpu: 0.0.40
codegen_flags: <defaults>
</compile_context>

<pallas_src>
import functools

import jax
import jax.numpy as jnp
import numpy as np
from jax import lax
from jax.experimental import pallas as pl
from jax.experimental.pallas import tpu as pltpu


def _vmem_capacity_bytes():
    """Physical VMEM per TensorCore, with a conservative (v7x) fallback."""
    try:
        cap = int(pltpu.get_tpu_info().vmem_capacity_bytes)
        if cap > 0:
            return cap
    except Exception:
        pass
    return 64 * 1024 * 1024


def _vmem_estimate(C, Cq, S, tq, mm_bytes):
    """Rough working-set estimate (bytes) for one grid step."""
    est = 2 * C * S * 4                   # x block (double-buffered by pipeline)
    est += 2 * C * tq * 4                 # output block (double-buffered)
    est += max(Cq, 8) * S * mm_bytes      # kp scratch (sublane-padded)
    est += C * S * mm_bytes               # v scratch
    est += tq * S * 4                     # energy (f32)
    est += tq * S * mm_bytes              # p fed to the MXU
    est += 3 * C * tq * 4                 # out / residual temporaries
    return est


def _choose_q_tile(S, C, Cq, mm_bytes, budget):
    """Largest query-token tile (multiple of 128) whose working set fits VMEM."""
    candidates = [t for t in (512, 256, 128) if t <= S and S % t == 0]
    for t in candidates:
        if _vmem_estimate(C, Cq, S, t, mm_bytes) <= budget:
            return t
    if candidates:
        # TODO(synk): for huge S even tq=128 blows VMEM (v7x, 64 MiB); switch
        # to a flash-style online-softmax loop over key tiles (m/l/acc scratch).
        return candidates[-1]
    return S  # small / irregular spatial extent: single tile


def self_attn_kernel(x_ref, wq_ref, bq_ref, wk_ref, bk_ref, wv_ref, bv_ref,
                     gamma_ref, o_ref, kp_ref, v_ref, *, tq, mm_dtype):
    # x_ref  : (1, C, S)  all tokens of this batch element (resident across qi)
    # kp_ref : (Cq, S)    key projection scratch   (computed once per batch elem)
    # v_ref  : (C, S)     value projection scratch (computed once per batch elem)
    qi = pl.program_id(1)
    xb = x_ref.at[0]                       # (C, S) view, zero-cost
    S = x_ref.shape[2]

    # ---- once per batch element: key & value projections into VMEM scratch ----
    @pl.when(qi == 0)
    def _():
        x_full = xb[...]                                                   # (C, S)
        kp = jnp.dot(wk_ref[...], x_full,
                     preferred_element_type=jnp.float32) + bk_ref[...]     # (Cq, S)
        v = jnp.dot(wv_ref[...], x_full,
                    preferred_element_type=jnp.float32) + bv_ref[...]      # (C, S)
        kp_ref[...] = kp.astype(kp_ref.dtype)
        v_ref[...] = v.astype(v_ref.dtype)

    # ---- query tile: lane slice of the resident x block (no extra DMA) ----
    if tq == S:
        x_q = xb[...]                                                      # (C, S)
    else:
        start = pl.multiple_of(qi * tq, 128)
        x_q = xb[:, pl.ds(start, tq)]                                      # (C, tq)

    qp = jnp.dot(wq_ref[...], x_q,
                 preferred_element_type=jnp.float32) + bq_ref[...]         # (Cq, tq)
    qp = qp.astype(mm_dtype)

    # energy[i, j] = sum_c qp[c, i] * kp[c, j]   (bf16 operands, f32 acc)
    energy = lax.dot_general(qp, kp_ref[...], (((0,), (0,)), ((), ())),
                             preferred_element_type=jnp.float32)           # (tq, S)

    # Row softmax over keys, normalization deferred (f32 max / EUP exp).
    m = jnp.max(energy, axis=-1, keepdims=True)
    p = jnp.exp(energy - m)                                                # (tq, S)
    p_mm = p.astype(mm_dtype)

    # Row sums as a (1,S) x (S,tq) matmul so they land lane-dense as (1, tq).
    ones_row = jnp.ones((1, S), dtype=mm_dtype)
    l_row = lax.dot_general(ones_row, p_mm, (((1,), (1,)), ((), ())),
                            preferred_element_type=jnp.float32)            # (1, tq)

    # out_unnorm[c, i] = sum_j v[c, j] * p[i, j]
    out = lax.dot_general(v_ref[...], p_mm, (((1,), (1,)), ((), ())),
                          preferred_element_type=jnp.float32)              # (C, tq)

    # Deferred normalization + gamma folded into one (1, tq) scale vector.
    scale = gamma_ref[0] * pl.reciprocal(l_row, approx=True)               # (1, tq)
    o_ref[0] = (out * scale + x_q).astype(o_ref.dtype)


def self_attention(x_nchw, wq, bq, wk, bk, wv, bv, gamma, *, use_bf16=True):
    """SelfAttention forward.

    x_nchw : (B, C, H, W) f32
    wq, wk : (Cq, C) PyTorch 1x1-conv weight layout (Cout, Cin), Cq = C // 8
    wv     : (C, C);  bq, bk : (Cq,);  bv : (C,);  gamma : scalar
    """
    B, C, H, W = x_nchw.shape
    S = H * W
    Cq = wq.shape[0]

    mm_dtype = jnp.bfloat16 if use_bf16 else jnp.float32
    mm_bytes = 2 if use_bf16 else 4

    vmem_cap = _vmem_capacity_bytes()
    budget = max(vmem_cap - 16 * 1024 * 1024, vmem_cap // 2)
    tq = _choose_q_tile(S, C, Cq, mm_bytes, budget)
    nq = S // tq

    # NCHW -> (B, C, S): a pure reshape (no transpose pass in XLA).
    x_cs = x_nchw.reshape(B, C, S)

    wq_f = wq.astype(jnp.float32)
    wk_f = wk.astype(jnp.float32)
    wv_f = wv.astype(jnp.float32)
    bq_col = bq.reshape(Cq, 1).astype(jnp.float32)
    bk_col = bk.reshape(Cq, 1).astype(jnp.float32)
    bv_col = bv.reshape(C, 1).astype(jnp.float32)
    gamma_s = jnp.asarray(gamma, dtype=jnp.float32).reshape(1)

    # Always set the scoped VMEM limit, capped safely below physical VMEM.
    est = _vmem_estimate(C, Cq, S, tq, mm_bytes)
    vmem_limit = int(min(max(2 * est, 32 * 1024 * 1024),
                         vmem_cap - 8 * 1024 * 1024))

    flops = int(B * (2 * Cq * C * S        # K projection (once per batch elem)
                     + 2 * C * C * S       # V projection (once per batch elem)
                     + 2 * Cq * C * S      # Q projection (summed over tiles)
                     + 2 * Cq * S * S      # energy
                     + 2 * C * S * S       # attn @ V
                     + 2 * S * S))         # row sums
    cost = pl.CostEstimate(
        flops=flops,
        transcendentals=int(B * S * S),
        bytes_accessed=int(4 * (2 * B * C * S + 2 * Cq * C + C * C
                                + 2 * Cq + C + 1)))

    kernel = functools.partial(self_attn_kernel, tq=tq, mm_dtype=mm_dtype)

    out_cs = pl.pallas_call(
        kernel,
        out_shape=jax.ShapeDtypeStruct((B, C, S), x_nchw.dtype),
        grid_spec=pltpu.PrefetchScalarGridSpec(
            num_scalar_prefetch=0,
            grid=(B, nq),
            in_specs=[
                # x: block index changes only with b -> DMA'd once per batch
                # element; query tiles are sliced from this resident block.
                # TODO(synk): pipeline_mode=pl.Buffered(1) here would free
                # another C*S*4 bytes of VMEM on v7x.
                pl.BlockSpec((1, C, S), lambda b, qi: (b, 0, 0)),
                pl.BlockSpec((Cq, C), lambda b, qi: (0, 0)),    # Wq
                pl.BlockSpec((Cq, 1), lambda b, qi: (0, 0)),    # bq
                pl.BlockSpec((Cq, C), lambda b, qi: (0, 0)),    # Wk
                pl.BlockSpec((Cq, 1), lambda b, qi: (0, 0)),    # bk
                pl.BlockSpec((C, C), lambda b, qi: (0, 0)),     # Wv
                pl.BlockSpec((C, 1), lambda b, qi: (0, 0)),     # bv
                pl.BlockSpec(memory_space=pltpu.MemorySpace.SMEM),  # gamma
            ],
            out_specs=pl.BlockSpec((1, C, tq), lambda b, qi: (b, 0, qi)),
            scratch_shapes=[
                pltpu.VMEM((Cq, S), mm_dtype),   # key projection scratch
                pltpu.VMEM((C, S), mm_dtype),    # value projection scratch
            ],
        ),
        compiler_params=pltpu.CompilerParams(
            # qi carries the per-batch kp/v scratch -> must stay sequential;
            # B stays "parallel" so v7x's two TensorCores shard the batch.
            dimension_semantics=("parallel", "arbitrary"),
            vmem_limit_bytes=vmem_limit),
        cost_estimate=cost,
    )(x_cs, wq_f, bq_col, wk_f, bk_col, wv_f, bv_col, gamma_s)

    return out_cs.reshape(B, C, H, W)


def reference_forward(x, wq, bq, wk, bk, wv, bv, gamma):
    """Pure-JAX mirror of the PyTorch forward (NCHW semantics), high precision."""
    B, C, H, W = x.shape
    S = H * W
    hp = jax.lax.Precision.HIGHEST

    def conv1x1(x, w, b):  # w: (Cout, Cin), b: (Cout,)
        return jnp.einsum('oc,bchw->bohw', w, x, precision=hp) + b.reshape(1, -1, 1, 1)

    proj_query = conv1x1(x, wq, bq).reshape(B, -1, S).transpose(0, 2, 1)  # (B,S,Cq)
    proj_key = conv1x1(x, wk, bk).reshape(B, -1, S)                       # (B,Cq,S)
    energy = jnp.einsum('bic,bcj->bij', proj_query, proj_key, precision=hp)
    attention = jax.nn.softmax(energy, axis=-1)
    proj_value = conv1x1(x, wv, bv).reshape(B, -1, S)                     # (B,C,S)
    out = jnp.einsum('bcj,bij->bci', proj_value, attention, precision=hp)
    out = out.reshape(B, C, H, W)
    return gamma * out + x


if __name__ == "__main__":
    def run_case(case_idx, B, C, H, W):
        Cq = C // 8
        key = jax.random.fold_in(jax.random.PRNGKey(0), case_idx)
        kx, kq, kbq, kk, kbk, kv, kbv = jax.random.split(key, 7)

        x = jax.random.normal(kx, (B, C, H, W), dtype=jnp.float32)
        # PyTorch conv-weight layout (Cout, Cin) for the 1x1 kernels.
        wq = jax.random.normal(kq, (Cq, C), dtype=jnp.float32) * 0.1
        bq = jax.random.normal(kbq, (Cq,), dtype=jnp.float32) * 0.1
        wk = jax.random.normal(kk, (Cq, C), dtype=jnp.float32) * 0.1
        bk = jax.random.normal(kbk, (Cq,), dtype=jnp.float32) * 0.1
        wv = jax.random.normal(kv, (C, C), dtype=jnp.float32) * 0.1
        bv = jax.random.normal(kbv, (C,), dtype=jnp.float32) * 0.1
        # Module initializes gamma to 0 (output == x); use a nonzero value so
        # the attention path is actually exercised and verified.
        gamma = jnp.float32(0.5)

        ref = reference_forward(x, wq, bq, wk, bk, wv, bv, gamma)

        # f32 MXU path: tight check of the projection / layout / deferred-norm math.
        out_f32 = jax.block_until_ready(
            self_attention(x, wq, bq, wk, bk, wv, bv, gamma, use_bf16=False))
        np.testing.assert_allclose(np.asarray(out_f32), np.asarray(ref),
                                   rtol=5e-3, atol=5e-3)

        # bf16 fast path for both S^2 matmuls (production config).
        out_bf16 = jax.block_until_ready(
            self_attention(x, wq, bq, wk, bk, wv, bv, gamma, use_bf16=True))
        np.testing.assert_allclose(np.asarray(out_bf16), np.asarray(ref),
                                   rtol=2e-2, atol=2e-2)

    # Small shape: single query tile (tq == S).
    run_case(0, B=2, C=16, H=8, W=8)
    # Larger spatial extent: exercises nq > 1 query tiles and the per-batch
    # kp/v scratch hoist guarded by pl.when(qi == 0).
    run_case(1, B=2, C=32, H=32, W=32)

    print("KERNEL_OK")
</pallas_src>

<mosaic_0001>
module attributes {stable_mosaic.version = 11 : i64} {
  func.func @self_attn_kernel(%arg0: i32, %arg1: i32, %arg2: memref<1x16x64xf32, #tpu.memory_space<vmem>>, %arg3: memref<2x16xf32, #tpu.memory_space<vmem>>, %arg4: memref<2x1xf32, #tpu.memory_space<vmem>>, %arg5: memref<2x16xf32, #tpu.memory_space<vmem>>, %arg6: memref<2x1xf32, #tpu.memory_space<vmem>>, %arg7: memref<16x16xf32, #tpu.memory_space<vmem>>, %arg8: memref<16x1xf32, #tpu.memory_space<vmem>>, %arg9: memref<1xf32, #tpu.memory_space<smem>>, %arg10: memref<1x16x64xf32, #tpu.memory_space<vmem>>, %arg11: memref<2x64xf32, #tpu.memory_space<vmem>>, %arg12: memref<16x64xf32, #tpu.memory_space<vmem>>) attributes {dimension_semantics = [#tpu.dimension_semantics<parallel>, #tpu.dimension_semantics<arbitrary>], iteration_bounds = array<i64: 2, 1>, scalar_prefetch = 0 : i64, scratch_operands = 2 : i64, tpu.core_type = #tpu.core_type<tc>, window_params = [{transform_indices = @transform_0, window_bounds = array<i64: 1, 16, 64>}, {pipeline_mode = #tpu.pipeline_mode<synchronous>, transform_indices = @transform_1, window_bounds = array<i64: 2, 16>}, {pipeline_mode = #tpu.pipeline_mode<synchronous>, transform_indices = @transform_2, window_bounds = array<i64: 2, 1>}, {pipeline_mode = #tpu.pipeline_mode<synchronous>, transform_indices = @transform_3, window_bounds = array<i64: 2, 16>}, {pipeline_mode = #tpu.pipeline_mode<synchronous>, transform_indices = @transform_4, window_bounds = array<i64: 2, 1>}, {pipeline_mode = #tpu.pipeline_mode<synchronous>, transform_indices = @transform_5, window_bounds = array<i64: 16, 16>}, {pipeline_mode = #tpu.pipeline_mode<synchronous>, transform_indices = @transform_6, window_bounds = array<i64: 16, 1>}, {transform_indices = @transform_7, window_bounds = array<i64: 1>}, {transform_indices = @transform_8, window_bounds = array<i64: 1, 16, 64>}]} {
    %c0_i32 = arith.constant 0 : i32
    %0 = arith.cmpi eq, %arg1, %c0_i32 : i32
    %1 = arith.extui %0 : i1 to i32
    %c0_i32_0 = arith.constant 0 : i32
    %c0_i32_1 = arith.constant 0 : i32
    %2 = arith.cmpi ne, %1, %c0_i32_1 : i32
    scf.if %2 {
      %31 = arith.index_cast %c0_i32_0 : i32 to index
      %c0_21 = arith.constant 0 : index
      %c0_22 = arith.constant 0 : index
      %32 = vector.load %arg2[%31, %c0_21, %c0_22] : memref<1x16x64xf32, #tpu.memory_space<vmem>>, vector<1x16x64xf32>
      %33 = vector.shape_cast %32 : vector<1x16x64xf32> to vector<16x64xf32>
      %c0_23 = arith.constant 0 : index
      %c0_24 = arith.constant 0 : index
      %34 = vector.load %arg5[%c0_23, %c0_24] : memref<2x16xf32, #tpu.memory_space<vmem>>, vector<2x16xf32>
      %cst_25 = arith.constant dense<0.000000e+00> : vector<2x64xf32>
      %35 = tpu.matmul %34, %33, %cst_25 {dimension_numbers = #tpu.dot_dimension_numbers<[1], [0], [0], [1], [0, 0, 1, 1], [], []>} : vector<2x16xf32>, vector<16x64xf32>, vector<2x64xf32> -> vector<2x64xf32>
      %c0_26 = arith.constant 0 : index
      %c0_27 = arith.constant 0 : index
      %36 = vector.load %arg6[%c0_26, %c0_27] : memref<2x1xf32, #tpu.memory_space<vmem>>, vector<2x1xf32>
      %37 = vector.broadcast %36 : vector<2x1xf32> to vector<2x64xf32>
      %38 = arith.addf %35, %37 : vector<2x64xf32>
      %c0_28 = arith.constant 0 : index
      %c0_29 = arith.constant 0 : index
      %39 = vector.load %arg7[%c0_28, %c0_29] : memref<16x16xf32, #tpu.memory_space<vmem>>, vector<16x16xf32>
      %cst_30 = arith.constant dense<0.000000e+00> : vector<16x64xf32>
      %40 = tpu.matmul %39, %33, %cst_30 {dimension_numbers = #tpu.dot_dimension_numbers<[1], [0], [0], [1], [0, 0, 1, 1], [], []>} : vector<16x16xf32>, vector<16x64xf32>, vector<16x64xf32> -> vector<16x64xf32>
      %c0_31 = arith.constant 0 : index
      %c0_32 = arith.constant 0 : index
      %41 = vector.load %arg8[%c0_31, %c0_32] : memref<16x1xf32, #tpu.memory_space<vmem>>, vector<16x1xf32>
      %42 = vector.broadcast %41 : vector<16x1xf32> to vector<16x64xf32>
      %43 = arith.addf %40, %42 : vector<16x64xf32>
      %c0_33 = arith.constant 0 : index
      %c0_34 = arith.constant 0 : index
      %44 = vector.load %arg11[%c0_33, %c0_34] : memref<2x64xf32, #tpu.memory_space<vmem>>, vector<2x64xf32>
      tpu.vector_store %arg11[%c0_33, %c0_34], %38 {strides = array<i32>} : memref<2x64xf32, #tpu.memory_space<vmem>>, vector<2x64xf32>,
      %c0_35 = arith.constant 0 : index
      %c0_36 = arith.constant 0 : index
      %45 = vector.load %arg12[%c0_35, %c0_36] : memref<16x64xf32, #tpu.memory_space<vmem>>, vector<16x64xf32>
      tpu.vector_store %arg12[%c0_35, %c0_36], %43 {strides = array<i32>} : memref<16x64xf32, #tpu.memory_space<vmem>>, vector<16x64xf32>,
    } else {
    }
    %c0 = arith.constant 0 : index
    %c0_2 = arith.constant 0 : index
    %c0_3 = arith.constant 0 : index
    %3 = vector.load %arg2[%c0, %c0_2, %c0_3] : memref<1x16x64xf32, #tpu.memory_space<vmem>>, vector<1x16x64xf32>
    %4 = vector.shape_cast %3 : vector<1x16x64xf32> to vector<16x64xf32>
    %c0_4 = arith.constant 0 : index
    %c0_5 = arith.constant 0 : index
    %5 = vector.load %arg3[%c0_4, %c0_5] : memref<2x16xf32, #tpu.memory_space<vmem>>, vector<2x16xf32>
    %cst = arith.constant dense<0.000000e+00> : vector<2x64xf32>
    %6 = tpu.matmul %5, %4, %cst {dimension_numbers = #tpu.dot_dimension_numbers<[1], [0], [0], [1], [0, 0, 1, 1], [], []>} : vector<2x16xf32>, vector<16x64xf32>, vector<2x64xf32> -> vector<2x64xf32>
    %c0_6 = arith.constant 0 : index
    %c0_7 = arith.constant 0 : index
    %7 = vector.load %arg4[%c0_6, %c0_7] : memref<2x1xf32, #tpu.memory_space<vmem>>, vector<2x1xf32>
    %8 = vector.broadcast %7 : vector<2x1xf32> to vector<2x64xf32>
    %9 = arith.addf %6, %8 : vector<2x64xf32>
    %c0_8 = arith.constant 0 : index
    %c0_9 = arith.constant 0 : index
    %10 = vector.load %arg11[%c0_8, %c0_9] : memref<2x64xf32, #tpu.memory_space<vmem>>, vector<2x64xf32>
    %cst_10 = arith.constant dense<0.000000e+00> : vector<64x64xf32>
    %11 = tpu.matmul %9, %10, %cst_10 {dimension_numbers = #tpu.dot_dimension_numbers<[0], [0], [1], [1], [0, 1, 1, 1], [], []>} : vector<2x64xf32>, vector<2x64xf32>, vector<64x64xf32> -> vector<64x64xf32>
    %cst_11 = arith.constant dense<0xFF800000> : vector<64xf32>
    %12 = vector.multi_reduction <maximumf>, %11, %cst_11 [1] : vector<64x64xf32> to vector<64xf32>
    %13 = vector.shape_cast %12 : vector<64xf32> to vector<64x1xf32>
    %14 = vector.broadcast %13 : vector<64x1xf32> to vector<64x64xf32>
    %15 = arith.subf %11, %14 : vector<64x64xf32>
    %16 = math.exp %15 : vector<64x64xf32>
    %cst_12 = arith.constant 1.000000e+00 : f32
    %17 = vector.broadcast %cst_12 : f32 to vector<1x64xf32>
    %cst_13 = arith.constant dense<0.000000e+00> : vector<1x64xf32>
    %18 = tpu.matmul %17, %16, %cst_13 {dimension_numbers = #tpu.dot_dimension_numbers<[1], [1], [0], [0], [0, 0, 1, 0], [], []>} : vector<1x64xf32>, vector<64x64xf32>, vector<1x64xf32> -> vector<1x64xf32>
    %c0_14 = arith.constant 0 : index
    %c0_15 = arith.constant 0 : index
    %19 = vector.load %arg12[%c0_14, %c0_15] : memref<16x64xf32, #tpu.memory_space<vmem>>, vector<16x64xf32>
    %cst_16 = arith.constant dense<0.000000e+00> : vector<16x64xf32>
    %20 = tpu.matmul %19, %16, %cst_16 {dimension_numbers = #tpu.dot_dimension_numbers<[1], [1], [0], [0], [0, 0, 1, 0], [], []>} : vector<16x64xf32>, vector<64x64xf32>, vector<16x64xf32> -> vector<16x64xf32>
    %c0_17 = arith.constant 0 : index
    %21 = memref.load %arg9[%c0_17] : memref<1xf32, #tpu.memory_space<smem>>
    %22 = tpu.reciprocal %18 {approx = true} : vector<1x64xf32> -> vector<1x64xf32>
    %23 = vector.broadcast %21 : f32 to vector<1x64xf32>
    %24 = arith.mulf %23, %22 : vector<1x64xf32>
    %25 = vector.broadcast %24 : vector<1x64xf32> to vector<16x64xf32>
    %26 = arith.mulf %20, %25 : vector<16x64xf32>
    %27 = arith.addf %26, %4 : vector<16x64xf32>
    %c0_18 = arith.constant 0 : index
    %c0_19 = arith.constant 0 : index
    %c0_20 = arith.constant 0 : index
    %28 = vector.load %arg10[%c0_18, %c0_19, %c0_20] : memref<1x16x64xf32, #tpu.memory_space<vmem>>, vector<1x16x64xf32>
    %29 = vector.shape_cast %28 : vector<1x16x64xf32> to vector<16x64xf32>
    %30 = vector.shape_cast %27 : vector<16x64xf32> to vector<1x16x64xf32>
    tpu.vector_store %arg10[%c0_18, %c0_19, %c0_20], %30 {strides = array<i32>} : memref<1x16x64xf32, #tpu.memory_space<vmem>>, vector<1x16x64xf32>,
    return
  }
  func.func @transform_0(%arg0: i32, %arg1: i32) -> (i32, i32, i32) {
    %c0_i32 = arith.constant 0 : i32
    %c0_i32_0 = arith.constant 0 : i32
    %c0_i32_1 = arith.constant 0 : i32
    return %arg0, %c0_i32, %c0_i32_0 : i32, i32, i32
  }
  func.func @transform_1(%arg0: i32, %arg1: i32) -> (i32, i32) {
    %c0_i32 = arith.constant 0 : i32
    %c0_i32_0 = arith.constant 0 : i32
    %c0_i32_1 = arith.constant 0 : i32
    return %c0_i32, %c0_i32_0 : i32, i32
  }
  func.func @transform_2(%arg0: i32, %arg1: i32) -> (i32, i32) {
    %c0_i32 = arith.constant 0 : i32
    %c0_i32_0 = arith.constant 0 : i32
    %c0_i32_1 = arith.constant 0 : i32
    return %c0_i32, %c0_i32_0 : i32, i32
  }
  func.func @transform_3(%arg0: i32, %arg1: i32) -> (i32, i32) {
    %c0_i32 = arith.constant 0 : i32
    %c0_i32_0 = arith.constant 0 : i32
    %c0_i32_1 = arith.constant 0 : i32
    return %c0_i32, %c0_i32_0 : i32, i32
  }
  func.func @transform_4(%arg0: i32, %arg1: i32) -> (i32, i32) {
    %c0_i32 = arith.constant 0 : i32
    %c0_i32_0 = arith.constant 0 : i32
    %c0_i32_1 = arith.constant 0 : i32
    return %c0_i32, %c0_i32_0 : i32, i32
  }
  func.func @transform_5(%arg0: i32, %arg1: i32) -> (i32, i32) {
    %c0_i32 = arith.constant 0 : i32
    %c0_i32_0 = arith.constant 0 : i32
    %c0_i32_1 = arith.constant 0 : i32
    return %c0_i32, %c0_i32_0 : i32, i32
  }
  func.func @transform_6(%arg0: i32, %arg1: i32) -> (i32, i32) {
    %c0_i32 = arith.constant 0 : i32
    %c0_i32_0 = arith.constant 0 : i32
    %c0_i32_1 = arith.constant 0 : i32
    return %c0_i32, %c0_i32_0 : i32, i32
  }
  func.func @transform_7(%arg0: i32, %arg1: i32) -> i32 {
    %c0_i32 = arith.constant 0 : i32
    %c0_i32_0 = arith.constant 0 : i32
    return %c0_i32 : i32
  }
  func.func @transform_8(%arg0: i32, %arg1: i32) -> (i32, i32, i32) {
    %c0_i32 = arith.constant 0 : i32
    %c0_i32_0 = arith.constant 0 : i32
    return %arg0, %c0_i32, %arg1 : i32, i32, i32
  }
}

</mosaic_0001>

<llo_original>
// kernel: tpu_custom_call.1
$region0: #{tpu_custom_call.1}
  #allocation0 [shape = 'u32[]', space=smem, size = 0x4, offset = 0x4, fixed_abs, tag = 'smem constant byte address 0x4 - core index']
  #allocation1 [shape = 'u32[144,128]{1,0:T(1,128)}', space=vmem, size = 0x12000, scoped, tag = 'internal scratch']
  #allocation2 [shape = 'f32[2,64]{1,0:T(2,128)}', space=vmem, size = 0x400, scoped, tag = 'scratch operand']
  #allocation3 [shape = 'f32[16,64]{1,0:T(8,128)}', space=vmem, size = 0x2000, scoped, tag = 'scratch operand']
  #allocation4 [shape = 'f32[1]{0:T(128)S(6)}', space=smem, size = 0x200, scoped, tag = 'scoped memory for tpu_custom_call.1']
  %s0 = inlined_call_operand.hbm [shape: f32[2,16,64], index: 0, kind: input, shape index: {}]
  %s1 = inlined_call_operand.vmem [shape: f32[2,16], index: 1, kind: input, shape index: {}]
  %s2 = inlined_call_operand.vmem [shape: f32[2,1], index: 2, kind: input, shape index: {}]
  %s3 = inlined_call_operand.vmem [shape: f32[2,16], index: 3, kind: input, shape index: {}]
  %s4 = inlined_call_operand.vmem [shape: f32[2,1], index: 4, kind: input, shape index: {}]
  %s5 = inlined_call_operand.vmem [shape: f32[16,16], index: 5, kind: input, shape index: {}]
  %s6 = inlined_call_operand.vmem [shape: f32[16,1], index: 6, kind: input, shape index: {}]
  %s7 = inlined_call_operand.<no memory space> [shape: f32[1], index: 7, kind: input, shape index: {}]
  %s8 = inlined_call_operand.hbm [shape: f32[2,16,64], index: 8, kind: output, shape index: {}]
  %s9 = sld [smem:[#allocation0]]
  $region73: #{tpu_custom_call.1} parent=0
    _
  %s11 = ssub.s32 1, %s9
  %s12 = scalar_select 0, %s11, %s9
  %13 = sst [smem:[#allocation4]] %s7
  $region1: #{tpu_custom_call.1} parent=0
    #allocation5 [shape = 'u8[16384]{0}', space=vmem, size = 0x4000, scoped, tag = 'input window, operand 0']
    #allocation6 [shape = 's32[2]{0}', space=sflag, size = 0x8, scoped, tag = 'scoped memory for tpu_custom_call.1']
    #allocation7 [shape = 's32[2]{0}', space=sflag, size = 0x8, scoped, tag = 'scoped memory for tpu_custom_call.1']
    #allocation8 [shape = 'u8[16384]{0}', space=vmem, size = 0x4000, scoped, tag = 'output window, operand 0']
    %14 = vsyncpa [#allocation6], 0
    %s15 = scalar_lea.sflag [#allocation6], 1
    %16 = vsyncpa %s15, 0
    %17 = vsyncpa [#allocation7], 0
    %s18 = scalar_lea.sflag [#allocation7], 1
    %19 = vsyncpa %s18, 0
    loop: start=0, step=1, limit=4
    $region2: #{tpu_custom_call.1} parent=1 // loop_pre_header
      _
    $region3: #{tpu_custom_call.1} parent=1 // loop_header
      %s21 = sphi 0, %s25
      %p22 = scmp.ge.s32.totalorder %s21, 4
      %s28 = sphi 0, %s40
      %s29 = sphi 0, %s36
      %s30 = sphi 0, %s28
      %s31 = sphi 0, %s29
      %s32 = sphi 0, %s30
      %s33 = sphi 0, %s31
      %s43 = sphi 0, %s45
      %s46 = sphi 0, %s43
      %s47 = sphi 0, %s46
      %s63 = sphi 0, %s47
      %s67 = sphi 0, %s67
      %s69 = sphi 0, %s67
      %s70 = sphi 0, %s69
      %s84 = sphi 0, %s70
      %s88 = sphi 0, %s88
      %s90 = sphi 0, %s88
      %s91 = sphi 0, %s90
      %s105 = sphi 0, %s91
      %s109 = sphi 0, %s109
      %s111 = sphi 0, %s109
      %s112 = sphi 0, %s111
      %s126 = sphi 0, %s112
      %s130 = sphi 0, %s130
      %s132 = sphi 0, %s130
      %s133 = sphi 0, %s132
      %s147 = sphi 0, %s133
      %s151 = sphi 0, %s151
      %s153 = sphi 0, %s151
      %s154 = sphi 0, %s153
      %s168 = sphi 0, %s154
      %s172 = sphi 0, %s172
      %s174 = sphi 0, %s172
      %s175 = sphi 0, %s174
      %s189 = sphi 0, %s175
      %s193 = sphi 0, %s193
      %s195 = sphi 0, %s193
      %s196 = sphi 0, %s195
      %s210 = sphi 0, %s196
      %s218 = sphi 0, %s220
      %s221 = sphi 0, %s218
      %s222 = sphi 0, %s221
      %s238 = sphi 0, %s222
    $region4: #{tpu_custom_call.1} parent=1 // loop_header_branch
      %24 = sbr.rel (%p22) target = $region8
    $region5: #{tpu_custom_call.1} parent=1 // loop_body
      %s26 = ssub.s32 %s21, 1
      %s27 = ssub.s32 %s21, 2
      %s34 = sadd.s32 1, %s29
      %p35 = scmp.ge.s32.totalorder %s34, 1
      %s36 = scalar_select %p35, 0, %s34
      %s37 = sadd.s32 1, %s28
      %s38 = scalar_select %p35, %s37, %s28
      %p39 = scmp.ge.s32.totalorder %s38, 2
      %s40 = scalar_select %p39, 0, %s38
      %s41 = ssub.s32 %s28, %s40
      %p42 = scmp.eq.s32.totalorder %s41, 0
      %s44 = sadd.s32 %s43, 1
      %s45 = scalar_select %p42, %s43, %s44
      %p48 = pneg %p42
      %p49 = scmp.eq.s32.totalorder %s21, 1
      %p50 = por %p48, %p49
      %p51 = scmp.ne.s32.totalorder %s43, %s46
      %p52 = scmp.eq.s32.totalorder %s21, 0
      %p53 = por %p51, %p52
      %p54 = scmp.ne.s32.totalorder %s43, %s46
      %p55 = scmp.eq.s32.totalorder %s26, 1
      %p56 = por %p54, %p55
      %p57 = scmp.ne.s32.totalorder %s46, %s47
      %p58 = scmp.eq.s32.totalorder %s26, 0
      %p59 = por %p57, %p58
      %p60 = scmp.ne.s32.totalorder %s46, %s47
      %p61 = scmp.eq.s32.totalorder %s27, 1
      %p62 = por %p60, %p61
      %p64 = scmp.ne.s32.totalorder %s47, %s63
      %p65 = scmp.eq.s32.totalorder %s27, 0
      %p66 = por %p64, %p65
      %s68 = sadd.s32 %s67, 1
      %p71 = scmp.eq.s32.totalorder %s21, 1
      %p72 = scmp.ne.s32.totalorder %s67, %s69
      %p73 = scmp.eq.s32.totalorder %s21, 0
      %p74 = por %p72, %p73
      %p75 = scmp.ne.s32.totalorder %s67, %s69
      %p76 = scmp.eq.s32.totalorder %s26, 1
      %p77 = por %p75, %p76
      %p78 = scmp.ne.s32.totalorder %s69, %s70
      %p79 = scmp.eq.s32.totalorder %s26, 0
      %p80 = por %p78, %p79
      %p81 = scmp.ne.s32.totalorder %s69, %s70
      %p82 = scmp.eq.s32.totalorder %s27, 1
      %p83 = por %p81, %p82
      %p85 = scmp.ne.s32.totalorder %s70, %s84
      %p86 = scmp.eq.s32.totalorder %s27, 0
      %p87 = por %p85, %p86
      %s89 = sadd.s32 %s88, 1
      %p92 = scmp.eq.s32.totalorder %s21, 1
      %p93 = scmp.ne.s32.totalorder %s88, %s90
      %p94 = scmp.eq.s32.totalorder %s21, 0
      %p95 = por %p93, %p94
      %p96 = scmp.ne.s32.totalorder %s88, %s90
      %p97 = scmp.eq.s32.totalorder %s26, 1
      %p98 = por %p96, %p97
      %p99 = scmp.ne.s32.totalorder %s90, %s91
      %p100 = scmp.eq.s32.totalorder %s26, 0
      %p101 = por %p99, %p100
      %p102 = scmp.ne.s32.totalorder %s90, %s91
      %p103 = scmp.eq.s32.totalorder %s27, 1
      %p104 = por %p102, %p103
      %p106 = scmp.ne.s32.totalorder %s91, %s105
      %p107 = scmp.eq.s32.totalorder %s27, 0
      %p108 = por %p106, %p107
      %s110 = sadd.s32 %s109, 1
      %p113 = scmp.eq.s32.totalorder %s21, 1
      %p114 = scmp.ne.s32.totalorder %s109, %s111
      %p115 = scmp.eq.s32.totalorder %s21, 0
      %p116 = por %p114, %p115
      %p117 = scmp.ne.s32.totalorder %s109, %s111
      %p118 = scmp.eq.s32.totalorder %s26, 1
      %p119 = por %p117, %p118
      %p120 = scmp.ne.s32.totalorder %s111, %s112
      %p121 = scmp.eq.s32.totalorder %s26, 0
      %p122 = por %p120, %p121
      %p123 = scmp.ne.s32.totalorder %s111, %s112
      %p124 = scmp.eq.s32.totalorder %s27, 1
      %p125 = por %p123, %p124
      %p127 = scmp.ne.s32.totalorder %s112, %s126
      %p128 = scmp.eq.s32.totalorder %s27, 0
      %p129 = por %p127, %p128
      %s131 = sadd.s32 %s130, 1
      %p134 = scmp.eq.s32.totalorder %s21, 1
      %p135 = scmp.ne.s32.totalorder %s130, %s132
      %p136 = scmp.eq.s32.totalorder %s21, 0
      %p137 = por %p135, %p136
      %p138 = scmp.ne.s32.totalorder %s130, %s132
      %p139 = scmp.eq.s32.totalorder %s26, 1
      %p140 = por %p138, %p139
      %p141 = scmp.ne.s32.totalorder %s132, %s133
      %p142 = scmp.eq.s32.totalorder %s26, 0
      %p143 = por %p141, %p142
      %p144 = scmp.ne.s32.totalorder %s132, %s133
      %p145 = scmp.eq.s32.totalorder %s27, 1
      %p146 = por %p144, %p145
      %p148 = scmp.ne.s32.totalorder %s133, %s147
      %p149 = scmp.eq.s32.totalorder %s27, 0
      %p150 = por %p148, %p149
      %s152 = sadd.s32 %s151, 1
      %p155 = scmp.eq.s32.totalorder %s21, 1
      %p156 = scmp.ne.s32.totalorder %s151, %s153
      %p157 = scmp.eq.s32.totalorder %s21, 0
      %p158 = por %p156, %p157
      %p159 = scmp.ne.s32.totalorder %s151, %s153
      %p160 = scmp.eq.s32.totalorder %s26, 1
      %p161 = por %p159, %p160
      %p162 = scmp.ne.s32.totalorder %s153, %s154
      %p163 = scmp.eq.s32.totalorder %s26, 0
      %p164 = por %p162, %p163
      %p165 = scmp.ne.s32.totalorder %s153, %s154
      %p166 = scmp.eq.s32.totalorder %s27, 1
      %p167 = por %p165, %p166
      %p169 = scmp.ne.s32.totalorder %s154, %s168
      %p170 = scmp.eq.s32.totalorder %s27, 0
      %p171 = por %p169, %p170
      %s173 = sadd.s32 %s172, 1
      %p176 = scmp.eq.s32.totalorder %s21, 1
      %p177 = scmp.ne.s32.totalorder %s172, %s174
      %p178 = scmp.eq.s32.totalorder %s21, 0
      %p179 = por %p177, %p178
      %p180 = scmp.ne.s32.totalorder %s172, %s174
      %p181 = scmp.eq.s32.totalorder %s26, 1
      %p182 = por %p180, %p181
      %p183 = scmp.ne.s32.totalorder %s174, %s175
      %p184 = scmp.eq.s32.totalorder %s26, 0
      %p185 = por %p183, %p184
      %p186 = scmp.ne.s32.totalorder %s174, %s175
      %p187 = scmp.eq.s32.totalorder %s27, 1
      %p188 = por %p186, %p187
      %p190 = scmp.ne.s32.totalorder %s175, %s189
      %p191 = scmp.eq.s32.totalorder %s27, 0
      %p192 = por %p190, %p191
      %s194 = sadd.s32 %s193, 1
      %p197 = scmp.eq.s32.totalorder %s21, 1
      %p198 = scmp.ne.s32.totalorder %s193, %s195
      %p199 = scmp.eq.s32.totalorder %s21, 0
      %p200 = por %p198, %p199
      %p201 = scmp.ne.s32.totalorder %s193, %s195
      %p202 = scmp.eq.s32.totalorder %s26, 1
      %p203 = por %p201, %p202
      %p204 = scmp.ne.s32.totalorder %s195, %s196
      %p205 = scmp.eq.s32.totalorder %s26, 0
      %p206 = por %p204, %p205
      %p207 = scmp.ne.s32.totalorder %s195, %s196
      %p208 = scmp.eq.s32.totalorder %s27, 1
      %p209 = por %p207, %p208
      %p211 = scmp.ne.s32.totalorder %s196, %s210
      %p212 = scmp.eq.s32.totalorder %s27, 0
      %p213 = por %p211, %p212
      %s214 = ssub.s32 %s28, %s40
      %s215 = ssub.s32 %s29, %s36
      %s216 = sor.u32 %s214, %s215
      %p217 = scmp.eq.s32.totalorder %s216, 0
      %s219 = sadd.s32 %s218, 1
      %s220 = scalar_select %p217, %s218, %s219
      %p223 = pneg %p217
      %p224 = scmp.eq.s32.totalorder %s21, 1
      %p225 = por %p223, %p224
      %p226 = scmp.ne.s32.totalorder %s218, %s221
      %p227 = scmp.eq.s32.totalorder %s21, 0
      %p228 = por %p226, %p227
      %p229 = scmp.ne.s32.totalorder %s218, %s221
      %p230 = scmp.eq.s32.totalorder %s26, 1
      %p231 = por %p229, %p230
      %p232 = scmp.ne.s32.totalorder %s221, %s222
      %p233 = scmp.eq.s32.totalorder %s26, 0
      %p234 = por %p232, %p233
      %p235 = scmp.ne.s32.totalorder %s221, %s222
      %p236 = scmp.eq.s32.totalorder %s27, 1
      %p237 = por %p235, %p236
      %p239 = scmp.ne.s32.totalorder %s222, %s238
      %p240 = scmp.eq.s32.totalorder %s27, 0
      %p241 = por %p239, %p240
      %p242 = scmp.le.s32.totalorder 1, %s21
      %p243 = scmp.lt.s32.totalorder %s21, 3
      %p244 = pnand %p242, %p243
      %p245 = pneg %p244
      // Predicated region
      $region9: #{tpu_custom_call.1} parent=5 // pred_check
        _
      $region10: #{tpu_custom_call.1} parent=5 // pred_check_branch
        %247 = sbr.rel (%p244) target = $region12
      $region11: #{tpu_custom_call.1} parent=5 // pred_region
        %s248 = ssub.s32 %s21, 1
        // Predicated region
        $region13: #{tpu_custom_call.1} parent=11 // pred_check
          %p249 = pneg %p80
        $region14: #{tpu_custom_call.1} parent=11 // pred_check_branch
          %251 = sbr.rel (%p249) target = $region16
        $region15: #{tpu_custom_call.1} parent=11 // pred_region
          _
        $region16: #{tpu_custom_call.1} parent=11 // pred_fallthru
          _
        // Predicated region
        $region17: #{tpu_custom_call.1} parent=11 // pred_check
          %p252 = pneg %p101
        $region18: #{tpu_custom_call.1} parent=11 // pred_check_branch
          %254 = sbr.rel (%p252) target = $region20
        $region19: #{tpu_custom_call.1} parent=11 // pred_region
          _
        $region20: #{tpu_custom_call.1} parent=11 // pred_fallthru
          _
        // Predicated region
        $region21: #{tpu_custom_call.1} parent=11 // pred_check
          %p255 = pneg %p122
        $region22: #{tpu_custom_call.1} parent=11 // pred_check_branch
          %257 = sbr.rel (%p255) target = $region24
        $region23: #{tpu_custom_call.1} parent=11 // pred_region
          _
        $region24: #{tpu_custom_call.1} parent=11 // pred_fallthru
          _
        // Predicated region
        $region25: #{tpu_custom_call.1} parent=11 // pred_check
          %p258 = pneg %p143
        $region26: #{tpu_custom_call.1} parent=11 // pred_check_branch
          %260 = sbr.rel (%p258) target = $region28
        $region27: #{tpu_custom_call.1} parent=11 // pred_region
          _
        $region28: #{tpu_custom_call.1} parent=11 // pred_fallthru
          _
        // Predicated region
        $region29: #{tpu_custom_call.1} parent=11 // pred_check
          %p261 = pneg %p164
        $region30: #{tpu_custom_call.1} parent=11 // pred_check_branch
          %263 = sbr.rel (%p261) target = $region32
        $region31: #{tpu_custom_call.1} parent=11 // pred_region
          _
        $region32: #{tpu_custom_call.1} parent=11 // pred_fallthru
          _
        // Predicated region
        $region33: #{tpu_custom_call.1} parent=11 // pred_check
          %p264 = pneg %p185
        $region34: #{tpu_custom_call.1} parent=11 // pred_check_branch
          %266 = sbr.rel (%p264) target = $region36
        $region35: #{tpu_custom_call.1} parent=11 // pred_region
          _
        $region36: #{tpu_custom_call.1} parent=11 // pred_fallthru
          _
        // Predicated region
        $region37: #{tpu_custom_call.1} parent=11 // pred_check
          %p267 = pneg %p206
        $region38: #{tpu_custom_call.1} parent=11 // pred_check_branch
          %269 = sbr.rel (%p267) target = $region40
        $region39: #{tpu_custom_call.1} parent=11 // pred_region
          _
        $region40: #{tpu_custom_call.1} parent=11 // pred_fallthru
          _
      $region12: #{tpu_custom_call.1} parent=5 // pred_fallthru
        _
      %p270 = scmp.lt.s32.totalorder %s21, 2
      // Predicated region
      $region41: #{tpu_custom_call.1} parent=5 // pred_check
        %p271 = pneg %p270
      $region42: #{tpu_custom_call.1} parent=5 // pred_check_branch
        %273 = sbr.rel (%p271) target = $region44
      $region43: #{tpu_custom_call.1} parent=5 // pred_region
        // Predicated region
        $region45: #{tpu_custom_call.1} parent=43 // pred_check
          %p274 = pneg %p53
        $region46: #{tpu_custom_call.1} parent=43 // pred_check_branch
          %276 = sbr.rel (%p274) target = $region48
        $region47: #{tpu_custom_call.1} parent=43 // pred_region
          %s277 = sand.u32 %s43, 1
          %s278 = scalar_lea.sflag [#allocation6], %s277
          %s279 = sand.u32 %s43, 1
          %s280 = smul.addr %s279, 16
          %s281 = scalar_lea.vmem [#allocation5], %s280
          %s283 = ssub.s32 256, 256
          %284 = vsyncadd %s278, %s283
          %s285 = smul.addr %s28, 2
          %s286 = smul.addr %s285, 128
          %s287 = scalar_lea.hbm %s0, %s286
          %s288 = sshll.u32 %s281, 4
          %s289 = int_to_ptr.vmem [resolvable:$true] %s288
          %294 = dma.hbm_to_vmem [thread:$0]  %s287, 256, %s289, %s278, 128, 128, 8
        $region48: #{tpu_custom_call.1} parent=43 // pred_fallthru
          _
      $region44: #{tpu_custom_call.1} parent=5 // pred_fallthru
        _
      %p295 = scmp.le.s32.totalorder 1, %s21
      %p296 = scmp.lt.s32.totalorder %s21, 3
      %p297 = pnand %p295, %p296
      %p298 = pneg %p297
      // Predicated region
      $region49: #{tpu_custom_call.1} parent=5 // pred_check
        _
      $region50: #{tpu_custom_call.1} parent=5 // pred_check_branch
        %300 = sbr.rel (%p297) target = $region52
      $region51: #{tpu_custom_call.1} parent=5 // pred_region
        %s301 = ssub.s32 %s21, 1
        %s302 = sand.u32 %s46, 1
        %s303 = scalar_lea.sflag [#allocation6], %s302
        %s304 = sand.u32 %s46, 1
        %s305 = smul.addr %s304, 16
        %s306 = scalar_lea.vmem [#allocation5], %s305
        // Predicated region
        $region53: #{tpu_custom_call.1} parent=51 // pred_check
          %p307 = pneg %p59
        $region54: #{tpu_custom_call.1} parent=51 // pred_check_branch
          %309 = sbr.rel (%p307) target = $region56
        $region55: #{tpu_custom_call.1} parent=51 // pred_region
          %310 = dma.done %s303, 256
        $region56: #{tpu_custom_call.1} parent=51 // pred_fallthru
          _
        %s311 = sand.u32 %s46, 1
        %s312 = scalar_lea.sflag [#allocation6], %s311
        %s313 = sand.u32 %s46, 1
        %s314 = smul.addr %s313, 16
        %s315 = scalar_lea.vmem [#allocation5], %s314
        %p316 = pneg %p59
        %p317 = pneg %p56
        %p318 = pneg %p80
        %p319 = pneg %p77
        %p320 = pneg %p101
        %p321 = pneg %p98
        %p322 = pneg %p122
        %p323 = pneg %p119
        %p324 = pneg %p143
        %p325 = pneg %p140
        %p326 = pneg %p164
        %p327 = pneg %p161
        %p328 = pneg %p185
        %p329 = pneg %p182
        %p330 = pneg %p206
        %p331 = pneg %p203
        %p332 = pneg %p234
        %p333 = pneg %p231
        %s334 = sand.u32 %s221, 1
        %s335 = scalar_lea.sflag [#allocation7], %s334
        %s336 = sand.u32 %s221, 1
        %s337 = smul.addr %s336, 16
        %s338 = scalar_lea.vmem [#allocation8], %s337
        %p339 = scmp.eq.s32.totalorder %s31, 0
        // Predicated region
        $region57: #{tpu_custom_call.1} parent=51 // pred_check
          %p340 = pneg %p339
        $region58: #{tpu_custom_call.1} parent=51 // pred_check_branch
          %342 = sbr.rel (%p340) target = $region60
        $region59: #{tpu_custom_call.1} parent=51 // pred_region
          %v343 = vld [vmem:[%s306] sm:$0xff]
          %v344 = vld [vmem:[%s306 + $0x8] sm:$0xff]
          %v345 = vld [vmem:[%s3] sm:$0x3]
          %v346 = vld [vmem:[%s4] sm:$0x3]
          %348 = vset.pattern.permute.xlu0 0
          %349 = vperm.xlu0 %348, %v346
          %v350 = vpop.permute.xlu0 %349
          %vm352 = vcmask 130048
          %v354 = vsel %vm352, %v345, 0
          %356 = vmatprep.subr.mxu0 0.0
          %357 = vmatpush1.msra.mxu0 %v343
          %358 = vmatprep.subr.mxu0 0.0
          %359 = vmatpush1.msra.mxu0 %v344
          %360 = vmatprep.subr.mxu0 0.0
          %361 = vmatpush1.msra.mxu0 0.0
          %362 = vmatprep.subr.mxu0 0.0
          %363 = vmatpush1.msra.mxu0 0.0
          %364 = vmatprep.subr.mxu0 0.0
          %365 = vmatpush1.msra.mxu0 0.0
          %366 = vmatprep.subr.mxu0 0.0
          %367 = vmatpush1.msra.mxu0 0.0
          %368 = vmatprep.subr.mxu0 0.0
          %369 = vmatpush1.msra.mxu0 0.0
          %370 = vmatprep.subr.mxu0 0.0
          %371 = vmatpush1.msra.mxu0 0.0
          %372 = vmatprep.subr.mxu0 0.0
          %373 = vmatpush1.msra.mxu0 0.0
          %374 = vmatprep.subr.mxu0 0.0
          %375 = vmatpush1.msra.mxu0 0.0
          %376 = vmatprep.subr.mxu0 0.0
          %377 = vmatpush1.msra.mxu0 0.0
          %378 = vmatprep.subr.mxu0 0.0
          %379 = vmatpush1.msra.mxu0 0.0
          %380 = vmatprep.subr.mxu0 0.0
          %381 = vmatpush1.msra.mxu0 0.0
          %382 = vmatprep.subr.mxu0 0.0
          %383 = vmatpush1.msra.mxu0 0.0
          %384 = vmatprep.subr.mxu0 0.0
          %385 = vmatpush1.msra.mxu0 0.0
          %386 = vmatprep.subr.mxu0 0.0
          %387 = vmatpush1.msra.mxu0 0.0
          %388 = vmatprep.subr.mxu0 0.0
          %389 = vmatpush1.msra.mxu0 0.0
          %390 = vmatprep.subr.mxu0 0.0
          %391 = vmatpush1.msra.mxu0 0.0
          %392 = vmatprep.subr.mxu0 0.0
          %393 = vmatpush1.msra.mxu0 0.0
          %394 = vmatprep.subr.mxu0 0.0
          %395 = vmatpush1.msra.mxu0 0.0
          %396 = vmatprep.subr.mxu0 0.0
          %397 = vmatpush1.msra.mxu0 0.0
          %398 = vmatprep.subr.mxu0 0.0
          %399 = vmatpush1.msra.mxu0 0.0
          %400 = vmatprep.subr.mxu0 0.0
          %401 = vmatpush1.msra.mxu0 0.0
          %402 = vmatprep.subr.mxu0 0.0
          %403 = vmatpush1.msra.mxu0 0.0
          %404 = vmatprep.subr.mxu0 0.0
          %405 = vmatpush1.msra.mxu0 0.0
          %406 = vmatprep.subr.mxu0 0.0
          %407 = vmatpush1.msra.mxu0 0.0
          %408 = vmatprep.subr.mxu0 0.0
          %409 = vmatpush1.msra.mxu0 0.0
          %410 = vmatprep.subr.mxu0 0.0
          %411 = vmatpush1.msra.mxu0 0.0
          %412 = vmatprep.subr.mxu0 0.0
          %413 = vmatpush1.msra.mxu0 0.0
          %414 = vmatprep.subr.mxu0 0.0
          %415 = vmatpush1.msra.mxu0 0.0
          %416 = vmatprep.subr.mxu0 0.0
          %417 = vmatpush1.msra.mxu0 0.0
          %418 = vmatprep.subr.mxu0 0.0
          %419 = vmatpush1.msra.mxu0 0.0
          %420 = vmatprep.mubr.f32.mxu0 0.0
          %421 = vmatmul.mubr.f32.gmra.mrb[0].mxu0 %v354
          %v422 = vpop.f32.mrb[0].mxu0
          %v423 = vadd.f32 %v350, %v422
          %v424 = vpop.f32.mrb[0].mxu0
          %425 = vdwg.mxu0
          %v426 = vld [vmem:[%s5] sm:$0xff]
          %v427 = vld [vmem:[%s5 + $0x8] sm:$0xff]
          %v428 = vld [vmem:[%s6] sm:$0xff]
          %v429 = vld [vmem:[%s6 + $0x8] sm:$0xff]
          %431 = vset.pattern.permute.xlu0 0
          %432 = vperm.xlu0 %431, %v428
          %v433 = vpop.permute.xlu0 %432
          %436 = vset.pattern.permute.xlu0 0
          %437 = vperm.xlu0 %436, %v429
          %v438 = vpop.permute.xlu0 %437
          %v441 = vsel %vm352, %v426, 0
          %v444 = vsel %vm352, %v427, 0
          %446 = vmatprep.subr.mxu0 0.0
          %447 = vmatpush1.msra.mxu0 %v343
          %448 = vmatprep.subr.mxu0 0.0
          %449 = vmatpush1.msra.mxu0 %v344
          %450 = vmatprep.subr.mxu0 0.0
          %451 = vmatpush1.msra.mxu0 0.0
          %452 = vmatprep.subr.mxu0 0.0
          %453 = vmatpush1.msra.mxu0 0.0
          %454 = vmatprep.subr.mxu0 0.0
          %455 = vmatpush1.msra.mxu0 0.0
          %456 = vmatprep.subr.mxu0 0.0
          %457 = vmatpush1.msra.mxu0 0.0
          %458 = vmatprep.subr.mxu0 0.0
          %459 = vmatpush1.msra.mxu0 0.0
          %460 = vmatprep.subr.mxu0 0.0
          %461 = vmatpush1.msra.mxu0 0.0
          %462 = vmatprep.subr.mxu0 0.0
          %463 = vmatpush1.msra.mxu0 0.0
          %464 = vmatprep.subr.mxu0 0.0
          %465 = vmatpush1.msra.mxu0 0.0
          %466 = vmatprep.subr.mxu0 0.0
          %467 = vmatpush1.msra.mxu0 0.0
          %468 = vmatprep.subr.mxu0 0.0
          %469 = vmatpush1.msra.mxu0 0.0
          %470 = vmatprep.subr.mxu0 0.0
          %471 = vmatpush1.msra.mxu0 0.0
          %472 = vmatprep.subr.mxu0 0.0
          %473 = vmatpush1.msra.mxu0 0.0
          %474 = vmatprep.subr.mxu0 0.0
          %475 = vmatpush1.msra.mxu0 0.0
          %476 = vmatprep.subr.mxu0 0.0
          %477 = vmatpush1.msra.mxu0 0.0
          %478 = vmatprep.subr.mxu0 0.0
          %479 = vmatpush1.msra.mxu0 0.0
          %480 = vmatprep.subr.mxu0 0.0
          %481 = vmatpush1.msra.mxu0 0.0
          %482 = vmatprep.subr.mxu0 0.0
          %483 = vmatpush1.msra.mxu0 0.0
          %484 = vmatprep.subr.mxu0 0.0
          %485 = vmatpush1.msra.mxu0 0.0
          %486 = vmatprep.subr.mxu0 0.0
          %487 = vmatpush1.msra.mxu0 0.0
          %488 = vmatprep.subr.mxu0 0.0
          %489 = vmatpush1.msra.mxu0 0.0
          %490 = vmatprep.subr.mxu0 0.0
          %491 = vmatpush1.msra.mxu0 0.0
          %492 = vmatprep.subr.mxu0 0.0
          %493 = vmatpush1.msra.mxu0 0.0
          %494 = vmatprep.subr.mxu0 0.0
          %495 = vmatpush1.msra.mxu0 0.0
          %496 = vmatprep.subr.mxu0 0.0
          %497 = vmatpush1.msra.mxu0 0.0
          %498 = vmatprep.subr.mxu0 0.0
          %499 = vmatpush1.msra.mxu0 0.0
          %500 = vmatprep.subr.mxu0 0.0
          %501 = vmatpush1.msra.mxu0 0.0
          %502 = vmatprep.subr.mxu0 0.0
          %503 = vmatpush1.msra.mxu0 0.0
          %504 = vmatprep.subr.mxu0 0.0
          %505 = vmatpush1.msra.mxu0 0.0
          %506 = vmatprep.subr.mxu0 0.0
          %507 = vmatpush1.msra.mxu0 0.0
          %508 = vmatprep.subr.mxu0 0.0
          %509 = vmatpush1.msra.mxu0 0.0
          %510 = vmatprep.mubr.f32.mxu0 0.0
          %511 = vmatmul.mubr.f32.gmra.mrb[0].mxu0 %v441
          %v512 = vpop.f32.mrb[0].mxu0
          %v513 = vadd.f32 %v433, %v512
          %v514 = vpop.f32.mrb[0].mxu0
          %515 = vmatprep.mubr.f32.mxu0 0.0
          %516 = vmatmul.mubr.f32.gmra.mrb[0].mxu0 %v444
          %v517 = vpop.f32.mrb[0].mxu0
          %v518 = vadd.f32 %v438, %v517
          %v519 = vpop.f32.mrb[0].mxu0
          %520 = vdwg.mxu0
          %vm521 = vcmask 517120
          %522 = vst.msk [vmem:[#allocation2] sm:$0x3] %vm521, %v423
          %vm523 = vcmask 523264
          %524 = vst.msk [vmem:[#allocation3] sm:$0xff] %vm523, %v513
          %525 = vst.msk [vmem:[#allocation3 + $0x8] sm:$0xff] %vm523, %v518
        $region60: #{tpu_custom_call.1} parent=51 // pred_fallthru
          _
        %v526 = vld [vmem:[%s306] sm:$0xff]
        %v527 = vld [vmem:[%s306 + $0x8] sm:$0xff]
        %v528 = vld [vmem:[%s1] sm:$0x3]
        %v529 = vld [vmem:[%s2] sm:$0x3]
        %531 = vset.pattern.permute.xlu0 0
        %532 = vperm.xlu0 %531, %v529
        %v533 = vpop.permute.xlu0 %532
        %vm535 = vcmask 130048
        %v537 = vsel %vm535, %v528, 0
        %539 = vmatprep.subr.mxu0 0.0
        %540 = vmatpush1.msra.mxu0 %v526
        %541 = vmatprep.subr.mxu0 0.0
        %542 = vmatpush1.msra.mxu0 %v527
        %543 = vmatprep.subr.mxu0 0.0
        %544 = vmatpush1.msra.mxu0 0.0
        %545 = vmatprep.subr.mxu0 0.0
        %546 = vmatpush1.msra.mxu0 0.0
        %547 = vmatprep.subr.mxu0 0.0
        %548 = vmatpush1.msra.mxu0 0.0
        %549 = vmatprep.subr.mxu0 0.0
        %550 = vmatpush1.msra.mxu0 0.0
        %551 = vmatprep.subr.mxu0 0.0
        %552 = vmatpush1.msra.mxu0 0.0
        %553 = vmatprep.subr.mxu0 0.0
        %554 = vmatpush1.msra.mxu0 0.0
        %555 = vmatprep.subr.mxu0 0.0
        %556 = vmatpush1.msra.mxu0 0.0
        %557 = vmatprep.subr.mxu0 0.0
        %558 = vmatpush1.msra.mxu0 0.0
        %559 = vmatprep.subr.mxu0 0.0
        %560 = vmatpush1.msra.mxu0 0.0
        %561 = vmatprep.subr.mxu0 0.0
        %562 = vmatpush1.msra.mxu0 0.0
        %563 = vmatprep.subr.mxu0 0.0
        %564 = vmatpush1.msra.mxu0 0.0
        %565 = vmatprep.subr.mxu0 0.0
        %566 = vmatpush1.msra.mxu0 0.0
        %567 = vmatprep.subr.mxu0 0.0
        %568 = vmatpush1.msra.mxu0 0.0
        %569 = vmatprep.subr.mxu0 0.0
        %570 = vmatpush1.msra.mxu0 0.0
        %571 = vmatprep.subr.mxu0 0.0
        %572 = vmatpush1.msra.mxu0 0.0
        %573 = vmatprep.subr.mxu0 0.0
        %574 = vmatpush1.msra.mxu0 0.0
        %575 = vmatprep.subr.mxu0 0.0
        %576 = vmatpush1.msra.mxu0 0.0
        %577 = vmatprep.subr.mxu0 0.0
        %578 = vmatpush1.msra.mxu0 0.0
        %579 = vmatprep.subr.mxu0 0.0
        %580 = vmatpush1.msra.mxu0 0.0
        %581 = vmatprep.subr.mxu0 0.0
        %582 = vmatpush1.msra.mxu0 0.0
        %583 = vmatprep.subr.mxu0 0.0
        %584 = vmatpush1.msra.mxu0 0.0
        %585 = vmatprep.subr.mxu0 0.0
        %586 = vmatpush1.msra.mxu0 0.0
        %587 = vmatprep.subr.mxu0 0.0
        %588 = vmatpush1.msra.mxu0 0.0
        %589 = vmatprep.subr.mxu0 0.0
        %590 = vmatpush1.msra.mxu0 0.0
        %591 = vmatprep.subr.mxu0 0.0
        %592 = vmatpush1.msra.mxu0 0.0
        %593 = vmatprep.subr.mxu0 0.0
        %594 = vmatpush1.msra.mxu0 0.0
        %595 = vmatprep.subr.mxu0 0.0
        %596 = vmatpush1.msra.mxu0 0.0
        %597 = vmatprep.subr.mxu0 0.0
        %598 = vmatpush1.msra.mxu0 0.0
        %599 = vmatprep.subr.mxu0 0.0
        %600 = vmatpush1.msra.mxu0 0.0
        %601 = vmatprep.subr.mxu0 0.0
        %602 = vmatpush1.msra.mxu0 0.0
        %603 = vmatprep.mubr.f32.mxu0 0.0
        %604 = vmatmul.mubr.f32.gmra.mrb[0].mxu0 %v537
        %v605 = vpop.f32.mrb[0].mxu0
        %v606 = vadd.f32 %v533, %v605
        %v607 = vpop.f32.mrb[0].mxu0
        %608 = vdwg.mxu0
        %v609 = vld [vmem:[#allocation2] sm:$0x3]
        %610 = vxpose.xlu0.b32.start [1/16] %v606, 128
        %611 = vxpose.xlu0.b32.cont [2/16] 0.0, 128
        %612 = vxpose.xlu0.b32.cont [3/16] 0.0, 128
        %613 = vxpose.xlu0.b32.cont [4/16] 0.0, 128
        %614 = vxpose.xlu0.b32.cont [5/16] 0.0, 128
        %615 = vxpose.xlu0.b32.cont [6/16] 0.0, 128
        %616 = vxpose.xlu0.b32.cont [7/16] 0.0, 128
        %617 = vxpose.xlu0.b32.cont [8/16] 0.0, 128
        %618 = vxpose.xlu0.b32.cont [9/16] 0.0, 128
        %619 = vxpose.xlu0.b32.cont [10/16] 0.0, 128
        %620 = vxpose.xlu0.b32.cont [11/16] 0.0, 128
        %621 = vxpose.xlu0.b32.cont [12/16] 0.0, 128
        %622 = vxpose.xlu0.b32.cont [13/16] 0.0, 128
        %623 = vxpose.xlu0.b32.cont [14/16] 0.0, 128
        %624 = vxpose.xlu0.b32.cont [15/16] 0.0, 128
        %625 = vxpose.xlu0.b32.end [16/16] 0.0, 128
        %v626 = vpop.trf.xlu0
        %v627 = vpop.trf.xlu0
        %v628 = vpop.trf.xlu0
        %v629 = vpop.trf.xlu0
        %v630 = vpop.trf.xlu0
        %v631 = vpop.trf.xlu0
        %v632 = vpop.trf.xlu0
        %v633 = vpop.trf.xlu0
        %v634 = vpop.trf.xlu0
        %v635 = vpop.trf.xlu0
        %v636 = vpop.trf.xlu0
        %v637 = vpop.trf.xlu0
        %v638 = vpop.trf.xlu0
        %v639 = vpop.trf.xlu0
        %v640 = vpop.trf.xlu0
        %v641 = vpop.trf.xlu0
        %vm642 = vcmask 15360
        %v644 = vsel %vm642, %v626, 0
        %v647 = vsel %vm642, %v627, 0
        %v650 = vsel %vm642, %v628, 0
        %v653 = vsel %vm642, %v629, 0
        %v656 = vsel %vm642, %v630, 0
        %v659 = vsel %vm642, %v631, 0
        %v662 = vsel %vm642, %v632, 0
        %v665 = vsel %vm642, %v633, 0
        %vm667 = vcmask 1041408
        %v669 = vsel %vm667, %v609, 0
        %671 = vmatprep.subr.mxu0 0.0
        %672 = vmatpush1.msra.mxu0 %v669
        %673 = vmatprep.subr.mxu0 0.0
        %674 = vmatpush1.msra.mxu0 0.0
        %675 = vmatprep.subr.mxu0 0.0
        %676 = vmatpush1.msra.mxu0 0.0
        %677 = vmatprep.subr.mxu0 0.0
        %678 = vmatpush1.msra.mxu0 0.0
        %679 = vmatprep.subr.mxu0 0.0
        %680 = vmatpush1.msra.mxu0 0.0
        %681 = vmatprep.subr.mxu0 0.0
        %682 = vmatpush1.msra.mxu0 0.0
        %683 = vmatprep.subr.mxu0 0.0
        %684 = vmatpush1.msra.mxu0 0.0
        %685 = vmatprep.subr.mxu0 0.0
        %686 = vmatpush1.msra.mxu0 0.0
        %687 = vmatprep.subr.mxu0 0.0
        %688 = vmatpush1.msra.mxu0 0.0
        %689 = vmatprep.subr.mxu0 0.0
        %690 = vmatpush1.msra.mxu0 0.0
        %691 = vmatprep.subr.mxu0 0.0
        %692 = vmatpush1.msra.mxu0 0.0
        %693 = vmatprep.subr.mxu0 0.0
        %694 = vmatpush1.msra.mxu0 0.0
        %695 = vmatprep.subr.mxu0 0.0
        %696 = vmatpush1.msra.mxu0 0.0
        %697 = vmatprep.subr.mxu0 0.0
        %698 = vmatpush1.msra.mxu0 0.0
        %699 = vmatprep.subr.mxu0 0.0
        %700 = vmatpush1.msra.mxu0 0.0
        %701 = vmatprep.subr.mxu0 0.0
        %702 = vmatpush1.msra.mxu0 0.0
        %703 = vmatprep.subr.mxu0 0.0
        %704 = vmatpush1.msra.mxu0 0.0
        %705 = vmatprep.subr.mxu0 0.0
        %706 = vmatpush1.msra.mxu0 0.0
        %707 = vmatprep.subr.mxu0 0.0
        %708 = vmatpush1.msra.mxu0 0.0
        %709 = vmatprep.subr.mxu0 0.0
        %710 = vmatpush1.msra.mxu0 0.0
        %711 = vmatprep.subr.mxu0 0.0
        %712 = vmatpush1.msra.mxu0 0.0
        %713 = vmatprep.subr.mxu0 0.0
        %714 = vmatpush1.msra.mxu0 0.0
        %715 = vmatprep.subr.mxu0 0.0
        %716 = vmatpush1.msra.mxu0 0.0
        %717 = vmatprep.subr.mxu0 0.0
        %718 = vmatpush1.msra.mxu0 0.0
        %719 = vmatprep.subr.mxu0 0.0
        %720 = vmatpush1.msra.mxu0 0.0
        %721 = vmatprep.subr.mxu0 0.0
        %722 = vmatpush1.msra.mxu0 0.0
        %723 = vmatprep.subr.mxu0 0.0
        %724 = vmatpush1.msra.mxu0 0.0
        %725 = vmatprep.subr.mxu0 0.0
        %726 = vmatpush1.msra.mxu0 0.0
        %727 = vmatprep.subr.mxu0 0.0
        %728 = vmatpush1.msra.mxu0 0.0
        %729 = vmatprep.subr.mxu0 0.0
        %730 = vmatpush1.msra.mxu0 0.0
        %731 = vmatprep.subr.mxu0 0.0
        %732 = vmatpush1.msra.mxu0 0.0
        %733 = vmatprep.subr.mxu0 0.0
        %734 = vmatpush1.msra.mxu0 0.0
        %735 = vmatprep.mubr.f32.mxu0 0.0
        %736 = vmatmul.mubr.f32.gmra.mrb[0].mxu0 %v644
        %v737 = vpop.f32.mrb[0].mxu0
        %v738 = vadd.f32 0.0, %v737
        %v739 = vpop.f32.mrb[0].mxu0
        %740 = vmatprep.mubr.f32.mxu0 0.0
        %741 = vmatmul.mubr.f32.gmra.mrb[0].mxu0 %v647
        %v742 = vpop.f32.mrb[0].mxu0
        %v743 = vadd.f32 0.0, %v742
        %v744 = vpop.f32.mrb[0].mxu0
        %745 = vmatprep.mubr.f32.mxu0 0.0
        %746 = vmatmul.mubr.f32.gmra.mrb[0].mxu0 %v650
        %v747 = vpop.f32.mrb[0].mxu0
        %v748 = vadd.f32 0.0, %v747
        %v749 = vpop.f32.mrb[0].mxu0
        %750 = vmatprep.mubr.f32.mxu0 0.0
        %751 = vmatmul.mubr.f32.gmra.mrb[0].mxu0 %v653
        %v752 = vpop.f32.mrb[0].mxu0
        %v753 = vadd.f32 0.0, %v752
        %v754 = vpop.f32.mrb[0].mxu0
        %755 = vmatprep.mubr.f32.mxu0 0.0
        %756 = vmatmul.mubr.f32.gmra.mrb[0].mxu0 %v656
        %v757 = vpop.f32.mrb[0].mxu0
        %v758 = vadd.f32 0.0, %v757
        %v759 = vpop.f32.mrb[0].mxu0
        %760 = vmatprep.mubr.f32.mxu0 0.0
        %761 = vmatmul.mubr.f32.gmra.mrb[0].mxu0 %v659
        %v762 = vpop.f32.mrb[0].mxu0
        %v763 = vadd.f32 0.0, %v762
        %v764 = vpop.f32.mrb[0].mxu0
        %765 = vmatprep.mubr.f32.mxu0 0.0
        %766 = vmatmul.mubr.f32.gmra.mrb[0].mxu0 %v662
        %v767 = vpop.f32.mrb[0].mxu0
        %v768 = vadd.f32 0.0, %v767
        %v769 = vpop.f32.mrb[0].mxu0
        %770 = vmatprep.mubr.f32.mxu0 0.0
        %771 = vmatmul.mubr.f32.gmra.mrb[0].mxu0 %v665
        %v772 = vpop.f32.mrb[0].mxu0
        %v773 = vadd.f32 0.0, %v772
        %v774 = vpop.f32.mrb[0].mxu0
        %775 = vdwg.mxu0
        %vm776 = vcmask 523264
        %v777 = vsel %vm776, %v738, -inf
        %778 = vmax.xlane.f32.xlu0 %v777
        %v779 = vpop.xlane.xlu0 %778
        %v780 = vsel %vm776, %v743, -inf
        %781 = vmax.xlane.f32.xlu0 %v780
        %v782 = vpop.xlane.xlu0 %781
        %v783 = vsel %vm776, %v748, -inf
        %784 = vmax.xlane.f32.xlu0 %v783
        %v785 = vpop.xlane.xlu0 %784
        %v786 = vsel %vm776, %v753, -inf
        %787 = vmax.xlane.f32.xlu0 %v786
        %v788 = vpop.xlane.xlu0 %787
        %v789 = vsel %vm776, %v758, -inf
        %790 = vmax.xlane.f32.xlu0 %v789
        %v791 = vpop.xlane.xlu0 %790
        %v792 = vsel %vm776, %v763, -inf
        %793 = vmax.xlane.f32.xlu0 %v792
        %v794 = vpop.xlane.xlu0 %793
        %v795 = vsel %vm776, %v768, -inf
        %796 = vmax.xlane.f32.xlu0 %v795
        %v797 = vpop.xlane.xlu0 %796
        %v798 = vsel %vm776, %v773, -inf
        %799 = vmax.xlane.f32.xlu0 %v798
        %v800 = vpop.xlane.xlu0 %799
        %v801 = vsub.f32 %v738, %v779
        %v802 = vsub.f32 %v743, %v782
        %v803 = vsub.f32 %v748, %v785
        %v804 = vsub.f32 %v753, %v788
        %v805 = vsub.f32 %v758, %v791
        %v806 = vsub.f32 %v763, %v794
        %v807 = vsub.f32 %v768, %v797
        %v808 = vsub.f32 %v773, %v800
        %v809 = vmul.f32 %v801, 1.442695
        %v810 = vpow.pop %v809
        %v811 = vmul.f32 %v802, 1.442695
        %v812 = vpow.pop %v811
        %v813 = vmul.f32 %v803, 1.442695
        %v814 = vpow.pop %v813
        %v815 = vmul.f32 %v804, 1.442695
        %v816 = vpow.pop %v815
        %v817 = vmul.f32 %v805, 1.442695
        %v818 = vpow.pop %v817
        %v819 = vmul.f32 %v806, 1.442695
        %v820 = vpow.pop %v819
        %v821 = vmul.f32 %v807, 1.442695
        %v822 = vpow.pop %v821
        %v823 = vmul.f32 %v808, 1.442695
        %v824 = vpow.pop %v823
        %v826 = vsel %vm776, 1.0, 0
        %v829 = vsel %vm776, %v810, 0
        %v832 = vsel %vm776, %v812, 0
        %v835 = vsel %vm776, %v814, 0
        %v838 = vsel %vm776, %v816, 0
        %v841 = vsel %vm776, %v818, 0
        %v844 = vsel %vm776, %v820, 0
        %v847 = vsel %vm776, %v822, 0
        %v850 = vsel %vm776, %v824, 0
        %852 = vmatprep.subr.mxu0 0.0
        %853 = vmatpush1.xpose.msra.mxu0 %v829
        %854 = vmatprep.subr.mxu0 0.0
        %855 = vmatpush1.xpose.msra.mxu0 %v832
        %856 = vmatprep.subr.mxu0 0.0
        %857 = vmatpush1.xpose.msra.mxu0 %v835
        %858 = vmatprep.subr.mxu0 0.0
        %859 = vmatpush1.xpose.msra.mxu0 %v838
        %860 = vmatprep.subr.mxu0 0.0
        %861 = vmatpush1.xpose.msra.mxu0 %v841
        %862 = vmatprep.subr.mxu0 0.0
        %863 = vmatpush1.xpose.msra.mxu0 %v844
        %864 = vmatprep.subr.mxu0 0.0
        %865 = vmatpush1.xpose.msra.mxu0 %v847
        %866 = vmatprep.subr.mxu0 0.0
        %867 = vmatpush1.xpose.msra.mxu0 %v850
        %868 = vmatprep.subr.mxu0 0.0
        %869 = vmatpush1.xpose.msra.mxu0 0.0
        %870 = vmatprep.subr.mxu0 0.0
        %871 = vmatpush1.xpose.msra.mxu0 0.0
        %872 = vmatprep.subr.mxu0 0.0
        %873 = vmatpush1.xpose.msra.mxu0 0.0
        %874 = vmatprep.subr.mxu0 0.0
        %875 = vmatpush1.xpose.msra.mxu0 0.0
        %876 = vmatprep.subr.mxu0 0.0
        %877 = vmatpush1.xpose.msra.mxu0 0.0
        %878 = vmatprep.subr.mxu0 0.0
        %879 = vmatpush1.xpose.msra.mxu0 0.0
        %880 = vmatprep.subr.mxu0 0.0
        %881 = vmatpush1.xpose.msra.mxu0 0.0
        %882 = vmatprep.subr.mxu0 0.0
        %883 = vmatpush1.xpose.msra.mxu0 0.0
        %884 = vmatprep.subr.mxu0 0.0
        %885 = vmatpush1.xpose.msra.mxu0 0.0
        %886 = vmatprep.subr.mxu0 0.0
        %887 = vmatpush1.xpose.msra.mxu0 0.0
        %888 = vmatprep.subr.mxu0 0.0
        %889 = vmatpush1.xpose.msra.mxu0 0.0
        %890 = vmatprep.subr.mxu0 0.0
        %891 = vmatpush1.xpose.msra.mxu0 0.0
        %892 = vmatprep.subr.mxu0 0.0
        %893 = vmatpush1.xpose.msra.mxu0 0.0
        %894 = vmatprep.subr.mxu0 0.0
        %895 = vmatpush1.xpose.msra.mxu0 0.0
        %896 = vmatprep.subr.mxu0 0.0
        %897 = vmatpush1.xpose.msra.mxu0 0.0
        %898 = vmatprep.subr.mxu0 0.0
        %899 = vmatpush1.xpose.msra.mxu0 0.0
        %900 = vmatprep.subr.mxu0 0.0
        %901 = vmatpush1.xpose.msra.mxu0 0.0
        %902 = vmatprep.subr.mxu0 0.0
        %903 = vmatpush1.xpose.msra.mxu0 0.0
        %904 = vmatprep.subr.mxu0 0.0
        %905 = vmatpush1.xpose.msra.mxu0 0.0
        %906 = vmatprep.subr.mxu0 0.0
        %907 = vmatpush1.xpose.msra.mxu0 0.0
        %908 = vmatprep.subr.mxu0 0.0
        %909 = vmatpush1.xpose.msra.mxu0 0.0
        %910 = vmatprep.subr.mxu0 0.0
        %911 = vmatpush1.xpose.msra.mxu0 0.0
        %912 = vmatprep.subr.mxu0 0.0
        %913 = vmatpush1.xpose.msra.mxu0 0.0
        %914 = vmatprep.subr.mxu0 0.0
        %915 = vmatpush1.xpose.msra.mxu0 0.0
        %916 = vmatprep.mubr.f32.mxu0 0.0
        %917 = vmatmul.mubr.f32.gmra.mrb[0].mxu0 %v826
        %v918 = vpop.f32.mrb[0].mxu0
        %v919 = vadd.f32 0.0, %v918
        %v920 = vpop.f32.mrb[0].mxu0
        %921 = vdwg.mxu0
        %v922 = vld [vmem:[#allocation3] sm:$0xff]
        %v923 = vld [vmem:[#allocation3 + $0x8] sm:$0xff]
        %v925 = vsel %vm776, %v922, 0
        %v928 = vsel %vm776, %v923, 0
        %930 = vmatprep.subr.mxu0 0.0
        %931 = vmatpush1.xpose.msra.mxu0 %v829
        %932 = vmatprep.subr.mxu0 0.0
        %933 = vmatpush1.xpose.msra.mxu0 %v832
        %934 = vmatprep.subr.mxu0 0.0
        %935 = vmatpush1.xpose.msra.mxu0 %v835
        %936 = vmatprep.subr.mxu0 0.0
        %937 = vmatpush1.xpose.msra.mxu0 %v838
        %938 = vmatprep.subr.mxu0 0.0
        %939 = vmatpush1.xpose.msra.mxu0 %v841
        %940 = vmatprep.subr.mxu0 0.0
        %941 = vmatpush1.xpose.msra.mxu0 %v844
        %942 = vmatprep.subr.mxu0 0.0
        %943 = vmatpush1.xpose.msra.mxu0 %v847
        %944 = vmatprep.subr.mxu0 0.0
        %945 = vmatpush1.xpose.msra.mxu0 %v850
        %946 = vmatprep.subr.mxu0 0.0
        %947 = vmatpush1.xpose.msra.mxu0 0.0
        %948 = vmatprep.subr.mxu0 0.0
        %949 = vmatpush1.xpose.msra.mxu0 0.0
        %950 = vmatprep.subr.mxu0 0.0
        %951 = vmatpush1.xpose.msra.mxu0 0.0
        %952 = vmatprep.subr.mxu0 0.0
        %953 = vmatpush1.xpose.msra.mxu0 0.0
        %954 = vmatprep.subr.mxu0 0.0
        %955 = vmatpush1.xpose.msra.mxu0 0.0
        %956 = vmatprep.subr.mxu0 0.0
        %957 = vmatpush1.xpose.msra.mxu0 0.0
        %958 = vmatprep.subr.mxu0 0.0
        %959 = vmatpush1.xpose.msra.mxu0 0.0
        %960 = vmatprep.subr.mxu0 0.0
        %961 = vmatpush1.xpose.msra.mxu0 0.0
        %962 = vmatprep.subr.mxu0 0.0
        %963 = vmatpush1.xpose.msra.mxu0 0.0
        %964 = vmatprep.subr.mxu0 0.0
        %965 = vmatpush1.xpose.msra.mxu0 0.0
        %966 = vmatprep.subr.mxu0 0.0
        %967 = vmatpush1.xpose.msra.mxu0 0.0
        %968 = vmatprep.subr.mxu0 0.0
        %969 = vmatpush1.xpose.msra.mxu0 0.0
        %970 = vmatprep.subr.mxu0 0.0
        %971 = vmatpush1.xpose.msra.mxu0 0.0
        %972 = vmatprep.subr.mxu0 0.0
        %973 = vmatpush1.xpose.msra.mxu0 0.0
        %974 = vmatprep.subr.mxu0 0.0
        %975 = vmatpush1.xpose.msra.mxu0 0.0
        %976 = vmatprep.subr.mxu0 0.0
        %977 = vmatpush1.xpose.msra.mxu0 0.0
        %978 = vmatprep.subr.mxu0 0.0
        %979 = vmatpush1.xpose.msra.mxu0 0.0
        %980 = vmatprep.subr.mxu0 0.0
        %981 = vmatpush1.xpose.msra.mxu0 0.0
        %982 = vmatprep.subr.mxu0 0.0
        %983 = vmatpush1.xpose.msra.mxu0 0.0
        %984 = vmatprep.subr.mxu0 0.0
        %985 = vmatpush1.xpose.msra.mxu0 0.0
        %986 = vmatprep.subr.mxu0 0.0
        %987 = vmatpush1.xpose.msra.mxu0 0.0
        %988 = vmatprep.subr.mxu0 0.0
        %989 = vmatpush1.xpose.msra.mxu0 0.0
        %990 = vmatprep.subr.mxu0 0.0
        %991 = vmatpush1.xpose.msra.mxu0 0.0
        %992 = vmatprep.subr.mxu0 0.0
        %993 = vmatpush1.xpose.msra.mxu0 0.0
        %994 = vmatprep.mubr.f32.mxu0 0.0
        %995 = vmatmul.mubr.f32.gmra.mrb[0].mxu0 %v925
        %v996 = vpop.f32.mrb[0].mxu0
        %v997 = vadd.f32 0.0, %v996
        %v998 = vpop.f32.mrb[0].mxu0
        %999 = vmatprep.mubr.f32.mxu0 0.0
        %1000 = vmatmul.mubr.f32.gmra.mrb[0].mxu0 %v928
        %v1001 = vpop.f32.mrb[0].mxu0
        %v1002 = vadd.f32 0.0, %v1001
        %v1003 = vpop.f32.mrb[0].mxu0
        %1004 = vdwg.mxu0
        %s1005 = sld [smem:[#allocation4]]
        %v1006 = vrcp.pop %v919
        %v1007 = vstv %s1005
        %v1008 = vmul.f32 %v1007, %v1006
        %v1009 = vlaneseq
        %v1010 = vshrl.u32 %v1009, 7
        %v1011 = vsub.s32 0, %v1010
        %v1012 = vrot.slane %v1008, %v1011
        %v1013 = vmul.f32 %v997, %v1012
        %v1014 = vmul.f32 %v1002, %v1012
        %v1015 = vadd.f32 %v1013, %v526
        %v1016 = vadd.f32 %v1014, %v527
        %1017 = vst.msk [vmem:[%s338] sm:$0xff] %vm776, %v1015
        %1018 = vst.msk [vmem:[%s338 + $0x8] sm:$0xff] %vm776, %v1016
        %s1019 = sand.u32 %s221, 1
        %s1020 = scalar_lea.sflag [#allocation7], %s1019
        %s1021 = sand.u32 %s221, 1
        %s1022 = smul.addr %s1021, 16
        %s1023 = scalar_lea.vmem [#allocation8], %s1022
        // Predicated region
        $region61: #{tpu_custom_call.1} parent=51 // pred_check
          %p1024 = pneg %p231
        $region62: #{tpu_custom_call.1} parent=51 // pred_check_branch
          %1026 = sbr.rel (%p1024) target = $region64
        $region63: #{tpu_custom_call.1} parent=51 // pred_region
          %s1028 = ssub.s32 256, 256
          %1029 = vsyncadd %s1020, %s1028
          %s1030 = smul.addr %s30, 2
          %s1031 = sadd.s32 %s31, %s1030
          %s1032 = smul.addr %s1031, 128
          %s1033 = scalar_lea.hbm %s8, %s1032
          %s1034 = sshll.u32 %s1023, 4
          %s1035 = int_to_ptr.vmem [resolvable:$true] %s1034
          %1040 = dma.vmem_to_hbm [thread:$0]  %s1035, 256, %s1033, %s1020, 128, 128, 8
        $region64: #{tpu_custom_call.1} parent=51 // pred_fallthru
          _
      $region52: #{tpu_custom_call.1} parent=5 // pred_fallthru
        _
      %p1041 = scmp.le.s32.totalorder 2, %s21
      // Predicated region
      $region65: #{tpu_custom_call.1} parent=5 // pred_check
        %p1042 = pneg %p1041
      $region66: #{tpu_custom_call.1} parent=5 // pred_check_branch
        %1044 = sbr.rel (%p1042) target = $region68
      $region67: #{tpu_custom_call.1} parent=5 // pred_region
        %s1045 = ssub.s32 %s21, 2
        // Predicated region
        $region69: #{tpu_custom_call.1} parent=67 // pred_check
          %p1046 = pneg %p237
        $region70: #{tpu_custom_call.1} parent=67 // pred_check_branch
          %1048 = sbr.rel (%p1046) target = $region72
        $region71: #{tpu_custom_call.1} parent=67 // pred_region
          %s1049 = sand.u32 %s222, 1
          %s1050 = scalar_lea.sflag [#allocation7], %s1049
          %s1051 = sand.u32 %s222, 1
          %s1052 = smul.addr %s1051, 16
          %s1053 = scalar_lea.vmem [#allocation8], %s1052
          %1054 = dma.done %s1050, 256
        $region72: #{tpu_custom_call.1} parent=67 // pred_fallthru
          _
      $region68: #{tpu_custom_call.1} parent=5 // pred_fallthru
        _
    $region6: #{tpu_custom_call.1} parent=1 // loop_footer
      %s25 = sadd.s32 1, %s21
    $region7: #{tpu_custom_call.1} parent=1 // loop_footer_branch
      %20 = sbr.rel target = $region3
    $region8: #{tpu_custom_call.1} parent=1 // loop_exit
      _
    %1055 = vsyncpa [#allocation6], 1
    %s1056 = scalar_lea.sflag [#allocation6], 1
    %1057 = vsyncpa %s1056, 1
    %1058 = vsyncpa [#allocation7], 1
    %s1059 = scalar_lea.sflag [#allocation7], 1
    %1060 = vsyncpa %s1059, 1

</llo_original>
